<compile_context>
chip_gen: v7x
topology: tpu7x:2x2x1
jax: 0.10.0
libtpu: 0.0.40
codegen_flags: <defaults>
</compile_context>

<pallas_src>
import jax
import jax.numpy as jnp
from jax import lax
from jax.experimental import pallas as pl
from jax.experimental.pallas import tpu as pltpu


def _round_up(n, m):
    return ((n + m - 1) // m) * m


def _gelu(x):
    # tanh-approximate GELU (see TODO above); math kept in f32.
    c = jnp.float32(0.7978845608028654)  # sqrt(2/pi)
    return 0.5 * x * (1.0 + jnp.tanh(c * (x + 0.044715 * x * x * x)))


def _layer_norm(h, gamma, beta, mask, inv_n, eps=1e-5):
    """One-pass LayerNorm: var = E[h^2] - E[h]^2, padded lanes masked out."""
    hm = h if mask is None else jnp.where(mask, h, 0.0)
    s = jnp.sum(hm, axis=-1, keepdims=True)
    ss = jnp.sum(hm * hm, axis=-1, keepdims=True)
    mu = s * inv_n
    var = ss * inv_n - mu * mu
    return (h - mu) * lax.rsqrt(var + eps) * gamma + beta


def _make_kernel(f_out_logical, has_projection):
    """Build the kernel body for one grid step over a batch tile."""

    def kernel(x_ref, w1_ref, b1_ref, g1_ref, be1_ref,
               w2_ref, b2_ref, g2_ref, be2_ref, *rest):
        if has_projection:
            wp_ref, bp_ref, o_ref = rest
        else:
            (o_ref,) = rest

        tm = x_ref.shape[0]
        fp_out = o_ref.shape[1]
        inv_n = jnp.float32(1.0 / f_out_logical)
        if fp_out != f_out_logical:
            mask = lax.broadcasted_iota(jnp.int32, (tm, fp_out), 1) < f_out_logical
        else:
            mask = None

        x_f32 = x_ref[...]                     # [TM, Fp_in] f32
        x_bf = x_f32.astype(jnp.bfloat16)      # MXU operand

        # dense1 + LayerNorm1 + GELU   (dropout1 == identity at inference)
        h = jnp.dot(x_bf, w1_ref[...], preferred_element_type=jnp.float32)
        h = h + b1_ref[...]
        h = _layer_norm(h, g1_ref[...], be1_ref[...], mask, inv_n)
        h = _gelu(h)

        # dense2 + LayerNorm2
        h2 = jnp.dot(h.astype(jnp.bfloat16), w2_ref[...],
                     preferred_element_type=jnp.float32)
        h2 = h2 + b2_ref[...]
        h2 = _layer_norm(h2, g2_ref[...], be2_ref[...], mask, inv_n)

        # identity branch
        if has_projection:
            ident = jnp.dot(x_bf, wp_ref[...], preferred_element_type=jnp.float32)
            ident = ident + bp_ref[...]
        else:
            # in_features == out_features: add x directly in f32 (no eye matmul,
            # no bf16 rounding of the residual path).
            ident = x_f32

        # residual add + GELU   (dropout2 == identity at inference)
        o_ref[...] = _gelu(h2 + ident).astype(o_ref.dtype)

    return kernel


def residual_block(x, params, *, batch_tile=128):
    """x: [B, in_features] f32.  params: dict of f32 arrays (see init_params)."""
    B, F_in = x.shape
    F_out = params["w1"].shape[1]
    has_proj = "wp" in params

    # Lane-dense padding of feature dims; batch tiled/padded to TM.
    Fp_in = _round_up(F_in, 128)
    Fp_out = _round_up(F_out, 128)
    TM = min(batch_tile, _round_up(B, 8))
    Bp = _round_up(B, TM)

    def pad2(a, rows, cols, dtype):
        return jnp.pad(a, ((0, rows - a.shape[0]), (0, cols - a.shape[1]))).astype(dtype)

    xp = pad2(x, Bp, Fp_in, jnp.float32)

    # Weights -> bf16 (MXU-native, half the resident VMEM / DMA);
    # biases and LayerNorm affine params stay f32.
    weight_args = [
        pad2(params["w1"], Fp_in, Fp_out, jnp.bfloat16),
        pad2(params["b1"], 1, Fp_out, jnp.float32),
        pad2(params["g1"], 1, Fp_out, jnp.float32),
        pad2(params["be1"], 1, Fp_out, jnp.float32),
        pad2(params["w2"], Fp_out, Fp_out, jnp.bfloat16),
        pad2(params["b2"], 1, Fp_out, jnp.float32),
        pad2(params["g2"], 1, Fp_out, jnp.float32),
        pad2(params["be2"], 1, Fp_out, jnp.float32),
    ]
    if has_proj:
        weight_args += [
            pad2(params["wp"], Fp_in, Fp_out, jnp.bfloat16),
            pad2(params["bp"], 1, Fp_out, jnp.float32),
        ]

    # Batch-tiled x / out; weights resident (constant index_map -> DMA'd once).
    x_spec = pl.BlockSpec((TM, Fp_in), lambda i: (i, 0))
    out_spec = pl.BlockSpec((TM, Fp_out), lambda i: (i, 0))
    w_specs = [pl.BlockSpec(a.shape, lambda i: (0, 0)) for a in weight_args]

    # VMEM budget: resident weights + double-buffered activation tiles + headroom.
    resident_bytes = sum(int(a.size) * a.dtype.itemsize for a in weight_args)
    act_bytes = 2 * (TM * Fp_in * 4 + TM * Fp_out * 4)
    vmem_limit = int(min(resident_bytes + act_bytes + (16 << 20), 100 << 20))

    kernel = _make_kernel(F_out, has_proj)

    out = pl.pallas_call(
        kernel,
        out_shape=jax.ShapeDtypeStruct((Bp, Fp_out), jnp.float32),
        grid=(Bp // TM,),
        in_specs=[x_spec] + w_specs,
        out_specs=out_spec,
        compiler_params=pltpu.CompilerParams(
            dimension_semantics=("parallel",),
            vmem_limit_bytes=vmem_limit,
        ),
    )(xp, *weight_args)

    return out[:B, :F_out]


def init_params(key, in_features, out_features):
    """Deterministic synthetic parameters matching the nn.Module shapes.

    nn.Linear weights are [out, in] in torch; stored here pre-transposed as
    [in, out].  Biases / LayerNorm params stored as [1, out].
    No projection entries when in_features == out_features (module has none).
    """
    ks = jax.random.split(key, 6)
    s1 = 1.0 / jnp.sqrt(in_features)
    s2 = 1.0 / jnp.sqrt(out_features)
    p = {
        "w1": jax.random.uniform(ks[0], (in_features, out_features), jnp.float32, -s1, s1),
        "b1": jax.random.uniform(ks[1], (1, out_features), jnp.float32, -s1, s1),
        "g1": jnp.ones((1, out_features), jnp.float32),
        "be1": jnp.zeros((1, out_features), jnp.float32),
        "w2": jax.random.uniform(ks[2], (out_features, out_features), jnp.float32, -s2, s2),
        "b2": jax.random.uniform(ks[3], (1, out_features), jnp.float32, -s2, s2),
        "g2": jnp.ones((1, out_features), jnp.float32),
        "be2": jnp.zeros((1, out_features), jnp.float32),
    }
    if in_features != out_features:
        p["wp"] = jax.random.uniform(ks[4], (in_features, out_features), jnp.float32, -s1, s1)
        p["bp"] = jax.random.uniform(ks[5], (1, out_features), jnp.float32, -s1, s1)
    return p


def _reference(x, params):
    """Pure-JAX f32 reference of the eval-mode forward pass."""
    def ln(h, g, b, eps=1e-5):
        mu = jnp.mean(h, axis=-1, keepdims=True)
        var = jnp.mean((h - mu) ** 2, axis=-1, keepdims=True)
        return (h - mu) * lax.rsqrt(var + eps) * g + b

    h = ln(x @ params["w1"] + params["b1"], params["g1"], params["be1"])
    h = _gelu(h)
    h2 = ln(h @ params["w2"] + params["b2"], params["g2"], params["be2"])
    ident = (x @ params["wp"] + params["bp"]) if "wp" in params else x
    return _gelu(h2 + ident)


if __name__ == "__main__":
    B, F_in, F_out = 8, 32, 64

    key = jax.random.PRNGKey(0)
    k_x, k_p = jax.random.split(key)
    x = jax.random.normal(k_x, (B, F_in), dtype=jnp.float32)
    params = init_params(k_p, F_in, F_out)

    y = residual_block(x, params)
    jax.block_until_ready(y)

    assert y.shape == (B, F_out), y.shape
    assert y.dtype == jnp.float32, y.dtype
    assert bool(jnp.all(jnp.isfinite(y)))

    # Loose tolerance: bf16 MXU operands + tanh-approx GELU vs exact f32 reference.
    y_ref = _reference(x, params)
    assert bool(jnp.max(jnp.abs(y - y_ref)) < 0.1)

    print("KERNEL_OK")
</pallas_src>

<mosaic_0001>
module attributes {stable_mosaic.version = 11 : i64} {
  func.func @kernel(%arg0: i32, %arg1: memref<8x128xf32, #tpu.memory_space<vmem>>, %arg2: memref<128x128xbf16, #tpu.memory_space<vmem>>, %arg3: memref<1x128xf32, #tpu.memory_space<vmem>>, %arg4: memref<1x128xf32, #tpu.memory_space<vmem>>, %arg5: memref<1x128xf32, #tpu.memory_space<vmem>>, %arg6: memref<128x128xbf16, #tpu.memory_space<vmem>>, %arg7: memref<1x128xf32, #tpu.memory_space<vmem>>, %arg8: memref<1x128xf32, #tpu.memory_space<vmem>>, %arg9: memref<1x128xf32, #tpu.memory_space<vmem>>, %arg10: memref<128x128xbf16, #tpu.memory_space<vmem>>, %arg11: memref<1x128xf32, #tpu.memory_space<vmem>>, %arg12: memref<8x128xf32, #tpu.memory_space<vmem>>) attributes {dimension_semantics = [#tpu.dimension_semantics<parallel>], iteration_bounds = array<i64: 1>, scalar_prefetch = 0 : i64, scratch_operands = 0 : i64, tpu.core_type = #tpu.core_type<tc>, window_params = [{transform_indices = @transform_0, window_bounds = array<i64: 8, 128>}, {pipeline_mode = #tpu.pipeline_mode<synchronous>, transform_indices = @transform_1, window_bounds = array<i64: 128, 128>}, {pipeline_mode = #tpu.pipeline_mode<synchronous>, transform_indices = @transform_2, window_bounds = array<i64: 1, 128>}, {pipeline_mode = #tpu.pipeline_mode<synchronous>, transform_indices = @transform_3, window_bounds = array<i64: 1, 128>}, {pipeline_mode = #tpu.pipeline_mode<synchronous>, transform_indices = @transform_4, window_bounds = array<i64: 1, 128>}, {pipeline_mode = #tpu.pipeline_mode<synchronous>, transform_indices = @transform_5, window_bounds = array<i64: 128, 128>}, {pipeline_mode = #tpu.pipeline_mode<synchronous>, transform_indices = @transform_6, window_bounds = array<i64: 1, 128>}, {pipeline_mode = #tpu.pipeline_mode<synchronous>, transform_indices = @transform_7, window_bounds = array<i64: 1, 128>}, {pipeline_mode = #tpu.pipeline_mode<synchronous>, transform_indices = @transform_8, window_bounds = array<i64: 1, 128>}, {pipeline_mode = #tpu.pipeline_mode<synchronous>, transform_indices = @transform_9, window_bounds = array<i64: 128, 128>}, {pipeline_mode = #tpu.pipeline_mode<synchronous>, transform_indices = @transform_10, window_bounds = array<i64: 1, 128>}, {transform_indices = @transform_11, window_bounds = array<i64: 8, 128>}]} {
    %0 = tpu.iota {dimensions = array<i32: 1>} : vector<8x128xi32>
    %c64_i32 = arith.constant 64 : i32
    %1 = vector.broadcast %c64_i32 : i32 to vector<8x128xi32>
    %2 = arith.cmpi slt, %0, %1 : vector<8x128xi32>
    %c0 = arith.constant 0 : index
    %c0_0 = arith.constant 0 : index
    %3 = vector.load %arg1[%c0, %c0_0] : memref<8x128xf32, #tpu.memory_space<vmem>>, vector<8x128xf32>
    %4 = arith.truncf %3 : vector<8x128xf32> to vector<8x128xbf16>
    %c0_1 = arith.constant 0 : index
    %c0_2 = arith.constant 0 : index
    %5 = vector.load %arg2[%c0_1, %c0_2] : memref<128x128xbf16, #tpu.memory_space<vmem>>, vector<128x128xbf16>
    %cst = arith.constant dense<0.000000e+00> : vector<8x128xf32>
    %6 = tpu.matmul %4, %5, %cst {dimension_numbers = #tpu.dot_dimension_numbers<[1], [0], [0], [1], [0, 0, 1, 1], [], []>} : vector<8x128xbf16>, vector<128x128xbf16>, vector<8x128xf32> -> vector<8x128xf32>
    %c0_3 = arith.constant 0 : index
    %c0_4 = arith.constant 0 : index
    %7 = vector.load %arg3[%c0_3, %c0_4] : memref<1x128xf32, #tpu.memory_space<vmem>>, vector<1x128xf32>
    %8 = vector.broadcast %7 : vector<1x128xf32> to vector<8x128xf32>
    %9 = arith.addf %6, %8 : vector<8x128xf32>
    %c0_5 = arith.constant 0 : index
    %c0_6 = arith.constant 0 : index
    %10 = vector.load %arg4[%c0_5, %c0_6] : memref<1x128xf32, #tpu.memory_space<vmem>>, vector<1x128xf32>
    %c0_7 = arith.constant 0 : index
    %c0_8 = arith.constant 0 : index
    %11 = vector.load %arg5[%c0_7, %c0_8] : memref<1x128xf32, #tpu.memory_space<vmem>>, vector<1x128xf32>
    %cst_9 = arith.constant 0.000000e+00 : f32
    %12 = vector.broadcast %cst_9 : f32 to vector<8x128xf32>
    %13 = arith.select %2, %9, %12 : vector<8x128xi1>, vector<8x128xf32>
    %cst_10 = arith.constant dense<0.000000e+00> : vector<8xf32>
    %14 = vector.multi_reduction <add>, %13, %cst_10 [1] : vector<8x128xf32> to vector<8xf32>
    %15 = vector.shape_cast %14 : vector<8xf32> to vector<8x1xf32>
    %16 = arith.mulf %13, %13 : vector<8x128xf32>
    %cst_11 = arith.constant dense<0.000000e+00> : vector<8xf32>
    %17 = vector.multi_reduction <add>, %16, %cst_11 [1] : vector<8x128xf32> to vector<8xf32>
    %18 = vector.shape_cast %17 : vector<8xf32> to vector<8x1xf32>
    %cst_12 = arith.constant 1.562500e-02 : f32
    %19 = vector.broadcast %cst_12 : f32 to vector<8x1xf32>
    %20 = arith.mulf %15, %19 : vector<8x1xf32>
    %cst_13 = arith.constant 1.562500e-02 : f32
    %21 = vector.broadcast %cst_13 : f32 to vector<8x1xf32>
    %22 = arith.mulf %18, %21 : vector<8x1xf32>
    %23 = arith.mulf %20, %20 : vector<8x1xf32>
    %24 = arith.subf %22, %23 : vector<8x1xf32>
    %25 = vector.broadcast %20 : vector<8x1xf32> to vector<8x128xf32>
    %26 = arith.subf %9, %25 : vector<8x128xf32>
    %cst_14 = arith.constant 9.99999974E-6 : f32
    %27 = vector.broadcast %cst_14 : f32 to vector<8x1xf32>
    %28 = arith.addf %24, %27 : vector<8x1xf32>
    %29 = math.rsqrt %28 : vector<8x1xf32>
    %30 = vector.broadcast %29 : vector<8x1xf32> to vector<8x128xf32>
    %31 = arith.mulf %26, %30 : vector<8x128xf32>
    %32 = vector.broadcast %10 : vector<1x128xf32> to vector<8x128xf32>
    %33 = arith.mulf %31, %32 : vector<8x128xf32>
    %34 = vector.broadcast %11 : vector<1x128xf32> to vector<8x128xf32>
    %35 = arith.addf %33, %34 : vector<8x128xf32>
    %cst_15 = arith.constant 5.000000e-01 : f32
    %36 = vector.broadcast %cst_15 : f32 to vector<8x128xf32>
    %37 = arith.mulf %36, %35 : vector<8x128xf32>
    %cst_16 = arith.constant 4.471500e-02 : f32
    %38 = vector.broadcast %cst_16 : f32 to vector<8x128xf32>
    %39 = arith.mulf %38, %35 : vector<8x128xf32>
    %40 = arith.mulf %39, %35 : vector<8x128xf32>
    %41 = arith.mulf %40, %35 : vector<8x128xf32>
    %42 = arith.addf %35, %41 : vector<8x128xf32>
    %cst_17 = arith.constant 0.797884583 : f32
    %43 = vector.broadcast %cst_17 : f32 to vector<8x128xf32>
    %44 = arith.mulf %43, %42 : vector<8x128xf32>
    %45 = math.tanh %44 : vector<8x128xf32>
    %cst_18 = arith.constant 1.000000e+00 : f32
    %46 = vector.broadcast %cst_18 : f32 to vector<8x128xf32>
    %47 = arith.addf %46, %45 : vector<8x128xf32>
    %48 = arith.mulf %37, %47 : vector<8x128xf32>
    %49 = arith.truncf %48 : vector<8x128xf32> to vector<8x128xbf16>
    %c0_19 = arith.constant 0 : index
    %c0_20 = arith.constant 0 : index
    %50 = vector.load %arg6[%c0_19, %c0_20] : memref<128x128xbf16, #tpu.memory_space<vmem>>, vector<128x128xbf16>
    %cst_21 = arith.constant dense<0.000000e+00> : vector<8x128xf32>
    %51 = tpu.matmul %49, %50, %cst_21 {dimension_numbers = #tpu.dot_dimension_numbers<[1], [0], [0], [1], [0, 0, 1, 1], [], []>} : vector<8x128xbf16>, vector<128x128xbf16>, vector<8x128xf32> -> vector<8x128xf32>
    %c0_22 = arith.constant 0 : index
    %c0_23 = arith.constant 0 : index
    %52 = vector.load %arg7[%c0_22, %c0_23] : memref<1x128xf32, #tpu.memory_space<vmem>>, vector<1x128xf32>
    %53 = vector.broadcast %52 : vector<1x128xf32> to vector<8x128xf32>
    %54 = arith.addf %51, %53 : vector<8x128xf32>
    %c0_24 = arith.constant 0 : index
    %c0_25 = arith.constant 0 : index
    %55 = vector.load %arg8[%c0_24, %c0_25] : memref<1x128xf32, #tpu.memory_space<vmem>>, vector<1x128xf32>
    %c0_26 = arith.constant 0 : index
    %c0_27 = arith.constant 0 : index
    %56 = vector.load %arg9[%c0_26, %c0_27] : memref<1x128xf32, #tpu.memory_space<vmem>>, vector<1x128xf32>
    %cst_28 = arith.constant 0.000000e+00 : f32
    %57 = vector.broadcast %cst_28 : f32 to vector<8x128xf32>
    %58 = arith.select %2, %54, %57 : vector<8x128xi1>, vector<8x128xf32>
    %cst_29 = arith.constant dense<0.000000e+00> : vector<8xf32>
    %59 = vector.multi_reduction <add>, %58, %cst_29 [1] : vector<8x128xf32> to vector<8xf32>
    %60 = vector.shape_cast %59 : vector<8xf32> to vector<8x1xf32>
    %61 = arith.mulf %58, %58 : vector<8x128xf32>
    %cst_30 = arith.constant dense<0.000000e+00> : vector<8xf32>
    %62 = vector.multi_reduction <add>, %61, %cst_30 [1] : vector<8x128xf32> to vector<8xf32>
    %63 = vector.shape_cast %62 : vector<8xf32> to vector<8x1xf32>
    %cst_31 = arith.constant 1.562500e-02 : f32
    %64 = vector.broadcast %cst_31 : f32 to vector<8x1xf32>
    %65 = arith.mulf %60, %64 : vector<8x1xf32>
    %cst_32 = arith.constant 1.562500e-02 : f32
    %66 = vector.broadcast %cst_32 : f32 to vector<8x1xf32>
    %67 = arith.mulf %63, %66 : vector<8x1xf32>
    %68 = arith.mulf %65, %65 : vector<8x1xf32>
    %69 = arith.subf %67, %68 : vector<8x1xf32>
    %70 = vector.broadcast %65 : vector<8x1xf32> to vector<8x128xf32>
    %71 = arith.subf %54, %70 : vector<8x128xf32>
    %cst_33 = arith.constant 9.99999974E-6 : f32
    %72 = vector.broadcast %cst_33 : f32 to vector<8x1xf32>
    %73 = arith.addf %69, %72 : vector<8x1xf32>
    %74 = math.rsqrt %73 : vector<8x1xf32>
    %75 = vector.broadcast %74 : vector<8x1xf32> to vector<8x128xf32>
    %76 = arith.mulf %71, %75 : vector<8x128xf32>
    %77 = vector.broadcast %55 : vector<1x128xf32> to vector<8x128xf32>
    %78 = arith.mulf %76, %77 : vector<8x128xf32>
    %79 = vector.broadcast %56 : vector<1x128xf32> to vector<8x128xf32>
    %80 = arith.addf %78, %79 : vector<8x128xf32>
    %c0_34 = arith.constant 0 : index
    %c0_35 = arith.constant 0 : index
    %81 = vector.load %arg10[%c0_34, %c0_35] : memref<128x128xbf16, #tpu.memory_space<vmem>>, vector<128x128xbf16>
    %cst_36 = arith.constant dense<0.000000e+00> : vector<8x128xf32>
    %82 = tpu.matmul %4, %81, %cst_36 {dimension_numbers = #tpu.dot_dimension_numbers<[1], [0], [0], [1], [0, 0, 1, 1], [], []>} : vector<8x128xbf16>, vector<128x128xbf16>, vector<8x128xf32> -> vector<8x128xf32>
    %c0_37 = arith.constant 0 : index
    %c0_38 = arith.constant 0 : index
    %83 = vector.load %arg11[%c0_37, %c0_38] : memref<1x128xf32, #tpu.memory_space<vmem>>, vector<1x128xf32>
    %84 = vector.broadcast %83 : vector<1x128xf32> to vector<8x128xf32>
    %85 = arith.addf %82, %84 : vector<8x128xf32>
    %86 = arith.addf %80, %85 : vector<8x128xf32>
    %cst_39 = arith.constant 5.000000e-01 : f32
    %87 = vector.broadcast %cst_39 : f32 to vector<8x128xf32>
    %88 = arith.mulf %87, %86 : vector<8x128xf32>
    %cst_40 = arith.constant 4.471500e-02 : f32
    %89 = vector.broadcast %cst_40 : f32 to vector<8x128xf32>
    %90 = arith.mulf %89, %86 : vector<8x128xf32>
    %91 = arith.mulf %90, %86 : vector<8x128xf32>
    %92 = arith.mulf %91, %86 : vector<8x128xf32>
    %93 = arith.addf %86, %92 : vector<8x128xf32>
    %cst_41 = arith.constant 0.797884583 : f32
    %94 = vector.broadcast %cst_41 : f32 to vector<8x128xf32>
    %95 = arith.mulf %94, %93 : vector<8x128xf32>
    %96 = math.tanh %95 : vector<8x128xf32>
    %cst_42 = arith.constant 1.000000e+00 : f32
    %97 = vector.broadcast %cst_42 : f32 to vector<8x128xf32>
    %98 = arith.addf %97, %96 : vector<8x128xf32>
    %99 = arith.mulf %88, %98 : vector<8x128xf32>
    %c0_43 = arith.constant 0 : index
    %c0_44 = arith.constant 0 : index
    %100 = vector.load %arg12[%c0_43, %c0_44] : memref<8x128xf32, #tpu.memory_space<vmem>>, vector<8x128xf32>
    tpu.vector_store %arg12[%c0_43, %c0_44], %99 {strides = array<i32>} : memref<8x128xf32, #tpu.memory_space<vmem>>, vector<8x128xf32>,
    return
  }
  func.func @transform_0(%arg0: i32) -> (i32, i32) {
    %c0_i32 = arith.constant 0 : i32
    %c0_i32_0 = arith.constant 0 : i32
    return %arg0, %c0_i32 : i32, i32
  }
  func.func @transform_1(%arg0: i32) -> (i32, i32) {
    %c0_i32 = arith.constant 0 : i32
    %c0_i32_0 = arith.constant 0 : i32
    %c0_i32_1 = arith.constant 0 : i32
    return %c0_i32, %c0_i32_0 : i32, i32
  }
  func.func @transform_2(%arg0: i32) -> (i32, i32) {
    %c0_i32 = arith.constant 0 : i32
    %c0_i32_0 = arith.constant 0 : i32
    %c0_i32_1 = arith.constant 0 : i32
    return %c0_i32, %c0_i32_0 : i32, i32
  }
  func.func @transform_3(%arg0: i32) -> (i32, i32) {
    %c0_i32 = arith.constant 0 : i32
    %c0_i32_0 = arith.constant 0 : i32
    %c0_i32_1 = arith.constant 0 : i32
    return %c0_i32, %c0_i32_0 : i32, i32
  }
  func.func @transform_4(%arg0: i32) -> (i32, i32) {
    %c0_i32 = arith.constant 0 : i32
    %c0_i32_0 = arith.constant 0 : i32
    %c0_i32_1 = arith.constant 0 : i32
    return %c0_i32, %c0_i32_0 : i32, i32
  }
  func.func @transform_5(%arg0: i32) -> (i32, i32) {
    %c0_i32 = arith.constant 0 : i32
    %c0_i32_0 = arith.constant 0 : i32
    %c0_i32_1 = arith.constant 0 : i32
    return %c0_i32, %c0_i32_0 : i32, i32
  }
  func.func @transform_6(%arg0: i32) -> (i32, i32) {
    %c0_i32 = arith.constant 0 : i32
    %c0_i32_0 = arith.constant 0 : i32
    %c0_i32_1 = arith.constant 0 : i32
    return %c0_i32, %c0_i32_0 : i32, i32
  }
  func.func @transform_7(%arg0: i32) -> (i32, i32) {
    %c0_i32 = arith.constant 0 : i32
    %c0_i32_0 = arith.constant 0 : i32
    %c0_i32_1 = arith.constant 0 : i32
    return %c0_i32, %c0_i32_0 : i32, i32
  }
  func.func @transform_8(%arg0: i32) -> (i32, i32) {
    %c0_i32 = arith.constant 0 : i32
    %c0_i32_0 = arith.constant 0 : i32
    %c0_i32_1 = arith.constant 0 : i32
    return %c0_i32, %c0_i32_0 : i32, i32
  }
  func.func @transform_9(%arg0: i32) -> (i32, i32) {
    %c0_i32 = arith.constant 0 : i32
    %c0_i32_0 = arith.constant 0 : i32
    %c0_i32_1 = arith.constant 0 : i32
    return %c0_i32, %c0_i32_0 : i32, i32
  }
  func.func @transform_10(%arg0: i32) -> (i32, i32) {
    %c0_i32 = arith.constant 0 : i32
    %c0_i32_0 = arith.constant 0 : i32
    %c0_i32_1 = arith.constant 0 : i32
    return %c0_i32, %c0_i32_0 : i32, i32
  }
  func.func @transform_11(%arg0: i32) -> (i32, i32) {
    %c0_i32 = arith.constant 0 : i32
    %c0_i32_0 = arith.constant 0 : i32
    return %arg0, %c0_i32 : i32, i32
  }
}

</mosaic_0001>

<llo_original>
// kernel: tpu_custom_call.1
$region0: #{tpu_custom_call.1}
  #allocation0 [shape = 'u32[]', space=smem, size = 0x4, offset = 0x4, fixed_abs, tag = 'smem constant byte address 0x4 - core index']
  #allocation1 [shape = 'u32[144,128]{1,0:T(1,128)}', space=vmem, size = 0x12000, scoped, tag = 'internal scratch']
  %s0 = inlined_call_operand.hbm [shape: f32[8,128], index: 0, kind: input, shape index: {}]
  %s1 = inlined_call_operand.hbm [shape: bf16[128,128], index: 1, kind: input, shape index: {}]
  %s2 = inlined_call_operand.vmem [shape: f32[1,128], index: 2, kind: input, shape index: {}]
  %s3 = inlined_call_operand.vmem [shape: f32[1,128], index: 3, kind: input, shape index: {}]
  %s4 = inlined_call_operand.vmem [shape: f32[1,128], index: 4, kind: input, shape index: {}]
  %s5 = inlined_call_operand.hbm [shape: bf16[128,128], index: 5, kind: input, shape index: {}]
  %s6 = inlined_call_operand.vmem [shape: f32[1,128], index: 6, kind: input, shape index: {}]
  %s7 = inlined_call_operand.vmem [shape: f32[1,128], index: 7, kind: input, shape index: {}]
  %s8 = inlined_call_operand.vmem [shape: f32[1,128], index: 8, kind: input, shape index: {}]
  %s9 = inlined_call_operand.hbm [shape: bf16[128,128], index: 9, kind: input, shape index: {}]
  %s10 = inlined_call_operand.vmem [shape: f32[1,128], index: 10, kind: input, shape index: {}]
  %s11 = inlined_call_operand.hbm [shape: f32[8,128], index: 11, kind: output, shape index: {}]
  %s12 = sld [smem:[#allocation0]]
  $region70: #{tpu_custom_call.1} parent=0
    _
  %s14 = ssub.s32 1, %s12
  %s15 = scalar_select 0, %s14, %s12
  $region1: #{tpu_custom_call.1} parent=0
    #allocation2 [shape = 'u8[4096]{0}', space=vmem, size = 0x1000, scoped, tag = 'input window, operand 0, single buffered']
    #allocation3 [shape = 's32[1]{0}', space=sflag, size = 0x4, scoped, tag = 'scoped memory for tpu_custom_call.1']
    #allocation4 [shape = 's32[1]{0}', space=sflag, size = 0x4, scoped, tag = 'scoped memory for tpu_custom_call.1']
    #allocation5 [shape = 'u8[32768]{0}', space=vmem, size = 0x8000, scoped, tag = 'input window, operand 1, single buffered']
    #allocation6 [shape = 's32[1]{0}', space=sflag, size = 0x4, scoped, tag = 'scoped memory for tpu_custom_call.1']
    #allocation7 [shape = 'u8[32768]{0}', space=vmem, size = 0x8000, scoped, tag = 'input window, operand 5, single buffered']
    #allocation8 [shape = 'u8[32768]{0}', space=vmem, size = 0x8000, scoped, tag = 'input window, operand 9, single buffered']
    #allocation9 [shape = 's32[1]{0}', space=sflag, size = 0x4, scoped, tag = 'scoped memory for tpu_custom_call.1']
    #allocation10 [shape = 'u8[4096]{0}', space=vmem, size = 0x1000, scoped, tag = 'output window, operand 0, single buffered']
    %16 = vsyncpa [#allocation3], 0
    %17 = vsyncpa [#allocation6], 0
    %18 = vsyncpa [#allocation9], 0
    %19 = vsyncpa [#allocation4], 0
    // Predicated region
    $region2: #{tpu_custom_call.1} parent=1 // pred_check
      _
    $region3: #{tpu_custom_call.1} parent=1 // pred_check_branch
      %21 = sbr.rel (0) target = $region5
    $region4: #{tpu_custom_call.1} parent=1 // pred_region
      %s23 = ssub.s32 128, 128
      %24 = vsyncadd [#allocation3], %s23
      %s26 = sshll.u32 [#allocation2], 4
      %s27 = int_to_ptr.vmem [resolvable:$true] %s26
      %29 = dma.hbm_to_vmem [thread:$0]  %s0, 128, %s27, [#allocation3]
    $region5: #{tpu_custom_call.1} parent=1 // pred_fallthru
      _
    // Predicated region
    $region6: #{tpu_custom_call.1} parent=1 // pred_check
      _
    $region7: #{tpu_custom_call.1} parent=1 // pred_check_branch
      %31 = sbr.rel (0) target = $region9
    $region8: #{tpu_custom_call.1} parent=1 // pred_region
      %s33 = ssub.s32 1024, 1024
      %34 = vsyncadd [#allocation6], %s33
      %s35 = sshll.u32 [#allocation5], 4
      %s36 = int_to_ptr.vmem [resolvable:$true] %s35
      %41 = dma.hbm_to_vmem [thread:$0]  %s1, 1024, %s36, [#allocation6], 64, 64, 4
    $region9: #{tpu_custom_call.1} parent=1 // pred_fallthru
      _
    // Predicated region
    $region10: #{tpu_custom_call.1} parent=1 // pred_check
      _
    $region11: #{tpu_custom_call.1} parent=1 // pred_check_branch
      %43 = sbr.rel (0) target = $region13
    $region12: #{tpu_custom_call.1} parent=1 // pred_region
      _
    $region13: #{tpu_custom_call.1} parent=1 // pred_fallthru
      _
    // Predicated region
    $region14: #{tpu_custom_call.1} parent=1 // pred_check
      _
    $region15: #{tpu_custom_call.1} parent=1 // pred_check_branch
      %45 = sbr.rel (0) target = $region17
    $region16: #{tpu_custom_call.1} parent=1 // pred_region
      _
    $region17: #{tpu_custom_call.1} parent=1 // pred_fallthru
      _
    // Predicated region
    $region18: #{tpu_custom_call.1} parent=1 // pred_check
      _
    $region19: #{tpu_custom_call.1} parent=1 // pred_check_branch
      %47 = sbr.rel (0) target = $region21
    $region20: #{tpu_custom_call.1} parent=1 // pred_region
      _
    $region21: #{tpu_custom_call.1} parent=1 // pred_fallthru
      _
    // Predicated region
    $region22: #{tpu_custom_call.1} parent=1 // pred_check
      _
    $region23: #{tpu_custom_call.1} parent=1 // pred_check_branch
      %49 = sbr.rel (0) target = $region25
    $region24: #{tpu_custom_call.1} parent=1 // pred_region
      %s51 = ssub.s32 1024, 1024
      %52 = vsyncadd [#allocation6], %s51
      %s53 = sshll.u32 [#allocation7], 4
      %s54 = int_to_ptr.vmem [resolvable:$true] %s53
      %59 = dma.hbm_to_vmem [thread:$0]  %s5, 1024, %s54, [#allocation6], 64, 64, 4
    $region25: #{tpu_custom_call.1} parent=1 // pred_fallthru
      _
    // Predicated region
    $region26: #{tpu_custom_call.1} parent=1 // pred_check
      _
    $region27: #{tpu_custom_call.1} parent=1 // pred_check_branch
      %61 = sbr.rel (0) target = $region29
    $region28: #{tpu_custom_call.1} parent=1 // pred_region
      _
    $region29: #{tpu_custom_call.1} parent=1 // pred_fallthru
      _
    // Predicated region
    $region30: #{tpu_custom_call.1} parent=1 // pred_check
      _
    $region31: #{tpu_custom_call.1} parent=1 // pred_check_branch
      %63 = sbr.rel (0) target = $region33
    $region32: #{tpu_custom_call.1} parent=1 // pred_region
      _
    $region33: #{tpu_custom_call.1} parent=1 // pred_fallthru
      _
    // Predicated region
    $region34: #{tpu_custom_call.1} parent=1 // pred_check
      _
    $region35: #{tpu_custom_call.1} parent=1 // pred_check_branch
      %65 = sbr.rel (0) target = $region37
    $region36: #{tpu_custom_call.1} parent=1 // pred_region
      _
    $region37: #{tpu_custom_call.1} parent=1 // pred_fallthru
      _
    // Predicated region
    $region38: #{tpu_custom_call.1} parent=1 // pred_check
      _
    $region39: #{tpu_custom_call.1} parent=1 // pred_check_branch
      %67 = sbr.rel (0) target = $region41
    $region40: #{tpu_custom_call.1} parent=1 // pred_region
      %s69 = ssub.s32 1024, 1024
      %70 = vsyncadd [#allocation9], %s69
      %s71 = sshll.u32 [#allocation8], 4
      %s72 = int_to_ptr.vmem [resolvable:$true] %s71
      %77 = dma.hbm_to_vmem [thread:$0]  %s9, 1024, %s72, [#allocation9], 64, 64, 4
    $region41: #{tpu_custom_call.1} parent=1 // pred_fallthru
      _
    // Predicated region
    $region42: #{tpu_custom_call.1} parent=1 // pred_check
      _
    $region43: #{tpu_custom_call.1} parent=1 // pred_check_branch
      %79 = sbr.rel (0) target = $region45
    $region44: #{tpu_custom_call.1} parent=1 // pred_region
      _
    $region45: #{tpu_custom_call.1} parent=1 // pred_fallthru
      _
    // Predicated region
    $region46: #{tpu_custom_call.1} parent=1 // pred_check
      _
    $region47: #{tpu_custom_call.1} parent=1 // pred_check_branch
      %81 = sbr.rel (0) target = $region49
    $region48: #{tpu_custom_call.1} parent=1 // pred_region
      %82 = dma.done [#allocation3], 128
    $region49: #{tpu_custom_call.1} parent=1 // pred_fallthru
      _
    // Predicated region
    $region50: #{tpu_custom_call.1} parent=1 // pred_check
      _
    $region51: #{tpu_custom_call.1} parent=1 // pred_check_branch
      %84 = sbr.rel (0) target = $region53
    $region52: #{tpu_custom_call.1} parent=1 // pred_region
      %85 = dma.done [#allocation6], 1024
    $region53: #{tpu_custom_call.1} parent=1 // pred_fallthru
      _
    // Predicated region
    $region54: #{tpu_custom_call.1} parent=1 // pred_check
      _
    $region55: #{tpu_custom_call.1} parent=1 // pred_check_branch
      %87 = sbr.rel (0) target = $region57
    $region56: #{tpu_custom_call.1} parent=1 // pred_region
      %88 = dma.done [#allocation6], 1024
    $region57: #{tpu_custom_call.1} parent=1 // pred_fallthru
      _
    // Predicated region
    $region58: #{tpu_custom_call.1} parent=1 // pred_check
      _
    $region59: #{tpu_custom_call.1} parent=1 // pred_check_branch
      %90 = sbr.rel (0) target = $region61
    $region60: #{tpu_custom_call.1} parent=1 // pred_region
      %91 = dma.done [#allocation9], 1024
    $region61: #{tpu_custom_call.1} parent=1 // pred_fallthru
      _
    %v93 = vlaneseq
    %v94 = vand.u32 %v93, 127
    %vm95 = vcmp.lt.s32.totalorder %v94, 64
    %v96 = vld [vmem:[#allocation2] sm:$0xff]
    %v97 = vpack.c.bf16 %v96, %v96
    %v98 = vld [vmem:[#allocation5] sm:$0xf]
    %v99 = vld [vmem:[#allocation5 + $0x4] sm:$0xf]
    %v100 = vld [vmem:[#allocation5 + $0x8] sm:$0xf]
    %v101 = vld [vmem:[#allocation5 + $0xc] sm:$0xf]
    %v102 = vld [vmem:[#allocation5 + $0x10] sm:$0xf]
    %v103 = vld [vmem:[#allocation5 + $0x14] sm:$0xf]
    %v104 = vld [vmem:[#allocation5 + $0x18] sm:$0xf]
    %v105 = vld [vmem:[#allocation5 + $0x1c] sm:$0xf]
    %v106 = vld [vmem:[#allocation5 + $0x20] sm:$0xf]
    %v107 = vld [vmem:[#allocation5 + $0x24] sm:$0xf]
    %v108 = vld [vmem:[#allocation5 + $0x28] sm:$0xf]
    %v109 = vld [vmem:[#allocation5 + $0x2c] sm:$0xf]
    %v110 = vld [vmem:[#allocation5 + $0x30] sm:$0xf]
    %v111 = vld [vmem:[#allocation5 + $0x34] sm:$0xf]
    %v112 = vld [vmem:[#allocation5 + $0x38] sm:$0xf]
    %v113 = vld [vmem:[#allocation5 + $0x3c] sm:$0xf]
    %v114 = vld [vmem:[%s2] sm:$0x1]
    %v116 = vlaneseq
    %v117 = vshrl.u32 %v116, 7
    %v118 = vsub.s32 0, %v117
    %v119 = vrot.slane %v114, %v118
    %v137 = vunpack.c.l.b16 %v98
    %v138 = vunpack.c.l.b16 %v99
    %v139 = vunpack.c.l.b16 %v100
    %v140 = vunpack.c.l.b16 %v101
    %v141 = vunpack.c.l.b16 %v102
    %v142 = vunpack.c.l.b16 %v103
    %v143 = vunpack.c.l.b16 %v104
    %v144 = vunpack.c.l.b16 %v105
    %v145 = vunpack.c.l.b16 %v106
    %v146 = vunpack.c.l.b16 %v107
    %v147 = vunpack.c.l.b16 %v108
    %v148 = vunpack.c.l.b16 %v109
    %v149 = vunpack.c.l.b16 %v110
    %v150 = vunpack.c.l.b16 %v111
    %v151 = vunpack.c.l.b16 %v112
    %v152 = vunpack.c.l.b16 %v113
    %v153 = vpack.c.b16 %v138, %v137
    %v154 = vpack.c.b16 %v140, %v139
    %v155 = vpack.c.b16 %v142, %v141
    %v156 = vpack.c.b16 %v144, %v143
    %v157 = vpack.c.b16 %v146, %v145
    %v158 = vpack.c.b16 %v148, %v147
    %v159 = vpack.c.b16 %v150, %v149
    %v160 = vpack.c.b16 %v152, %v151
    %169 = vmatprep.subr.bf16.mxu0 0
    %170 = vmatpush1.bf16.msra.mxu0 %v153
    %171 = vmatprep.subr.bf16.mxu0 0
    %172 = vmatpush1.bf16.msra.mxu0 %v154
    %173 = vmatprep.subr.bf16.mxu0 0
    %174 = vmatpush1.bf16.msra.mxu0 %v155
    %175 = vmatprep.subr.bf16.mxu0 0
    %176 = vmatpush1.bf16.msra.mxu0 %v156
    %177 = vmatprep.subr.bf16.mxu0 0
    %178 = vmatpush1.bf16.msra.mxu0 %v157
    %179 = vmatprep.subr.bf16.mxu0 0
    %180 = vmatpush1.bf16.msra.mxu0 %v158
    %181 = vmatprep.subr.bf16.mxu0 0
    %182 = vmatpush1.bf16.msra.mxu0 %v159
    %183 = vmatprep.subr.bf16.mxu0 0
    %184 = vmatpush1.bf16.msra.mxu0 %v160
    %185 = vmatprep.subr.bf16.mxu0 0
    %186 = vmatpush1.bf16.msra.mxu0 0
    %187 = vmatprep.subr.bf16.mxu0 0
    %188 = vmatpush1.bf16.msra.mxu0 0
    %189 = vmatprep.subr.bf16.mxu0 0
    %190 = vmatpush1.bf16.msra.mxu0 0
    %191 = vmatprep.subr.bf16.mxu0 0
    %192 = vmatpush1.bf16.msra.mxu0 0
    %193 = vmatprep.subr.bf16.mxu0 0
    %194 = vmatpush1.bf16.msra.mxu0 0
    %195 = vmatprep.subr.bf16.mxu0 0
    %196 = vmatpush1.bf16.msra.mxu0 0
    %197 = vmatprep.subr.bf16.mxu0 0
    %198 = vmatpush1.bf16.msra.mxu0 0
    %199 = vmatprep.subr.bf16.mxu0 0
    %200 = vmatpush1.bf16.msra.mxu0 0
    %201 = vmatprep.mubr.bf16.mxu0 0
    %202 = vmatmul.mubr.bf16.gmra.mrb[0].mxu0 %v97
    %v203 = vpop.f32.mrb[0].mxu0
    %v204 = vadd.f32 %v119, %v203
    %v205 = vpop.f32.mrb[0].mxu0
    %v206 = vpop.f32.mrb[0].mxu0
    %v207 = vpop.f32.mrb[0].mxu0
    %208 = vdwg.mxu0
    %v209 = vld [vmem:[%s3] sm:$0x1]
    %v210 = vld [vmem:[%s4] sm:$0x1]
    %v211 = vsel %vm95, %v204, 0.0
    %212 = vadd.xlane.f32.xlu0 %v211
    %v213 = vpop.xlane.xlu0 %212
    %v214 = vmul.f32 %v211, %v211
    %215 = vadd.xlane.f32.xlu0 %v214
    %v216 = vpop.xlane.xlu0 %215
    %v217 = vmul.f32 %v213, 0.015625
    %v218 = vmul.f32 %v216, 0.015625
    %v219 = vmul.f32 %v217, %v217
    %v220 = vsub.f32 %v218, %v219
    %v221 = vsub.f32 %v204, %v217
    %v222 = vadd.f32 %v220, 1e-05
    %v223 = vrsqrt.pop %v222
    %v224 = vmul.f32 %v221, %v223
    %v226 = vlaneseq
    %v227 = vshrl.u32 %v226, 7
    %v228 = vsub.s32 0, %v227
    %v229 = vrot.slane %v209, %v228
    %v231 = vmul.f32 %v224, %v229
    %v233 = vlaneseq
    %v234 = vshrl.u32 %v233, 7
    %v235 = vsub.s32 0, %v234
    %v236 = vrot.slane %v210, %v235
    %v238 = vadd.f32 %v231, %v236
    %v239 = vmul.f32 %v238, 0.5
    %v240 = vmul.f32 %v238, 0.044715
    %v241 = vmul.f32 %v240, %v238
    %v242 = vmul.f32 %v241, %v238
    %v243 = vadd.f32 %v238, %v242
    %v244 = vmul.f32 %v243, 0.7978846
    %v245 = vtanh.pop %v244
    %v246 = vadd.f32 %v245, 1.0
    %v247 = vmul.f32 %v239, %v246
    %v248 = vpack.c.bf16 %v247, %v247
    %v249 = vld [vmem:[#allocation7] sm:$0xf]
    %v250 = vld [vmem:[#allocation7 + $0x4] sm:$0xf]
    %v251 = vld [vmem:[#allocation7 + $0x8] sm:$0xf]
    %v252 = vld [vmem:[#allocation7 + $0xc] sm:$0xf]
    %v253 = vld [vmem:[#allocation7 + $0x10] sm:$0xf]
    %v254 = vld [vmem:[#allocation7 + $0x14] sm:$0xf]
    %v255 = vld [vmem:[#allocation7 + $0x18] sm:$0xf]
    %v256 = vld [vmem:[#allocation7 + $0x1c] sm:$0xf]
    %v257 = vld [vmem:[#allocation7 + $0x20] sm:$0xf]
    %v258 = vld [vmem:[#allocation7 + $0x24] sm:$0xf]
    %v259 = vld [vmem:[#allocation7 + $0x28] sm:$0xf]
    %v260 = vld [vmem:[#allocation7 + $0x2c] sm:$0xf]
    %v261 = vld [vmem:[#allocation7 + $0x30] sm:$0xf]
    %v262 = vld [vmem:[#allocation7 + $0x34] sm:$0xf]
    %v263 = vld [vmem:[#allocation7 + $0x38] sm:$0xf]
    %v264 = vld [vmem:[#allocation7 + $0x3c] sm:$0xf]
    %v265 = vld [vmem:[%s6] sm:$0x1]
    %v267 = vlaneseq
    %v268 = vshrl.u32 %v267, 7
    %v269 = vsub.s32 0, %v268
    %v270 = vrot.slane %v265, %v269
    %v288 = vunpack.c.l.b16 %v249
    %v289 = vunpack.c.l.b16 %v250
    %v290 = vunpack.c.l.b16 %v251
    %v291 = vunpack.c.l.b16 %v252
    %v292 = vunpack.c.l.b16 %v253
    %v293 = vunpack.c.l.b16 %v254
    %v294 = vunpack.c.l.b16 %v255
    %v295 = vunpack.c.l.b16 %v256
    %v296 = vunpack.c.l.b16 %v257
    %v297 = vunpack.c.l.b16 %v258
    %v298 = vunpack.c.l.b16 %v259
    %v299 = vunpack.c.l.b16 %v260
    %v300 = vunpack.c.l.b16 %v261
    %v301 = vunpack.c.l.b16 %v262
    %v302 = vunpack.c.l.b16 %v263
    %v303 = vunpack.c.l.b16 %v264
    %v304 = vpack.c.b16 %v289, %v288
    %v305 = vpack.c.b16 %v291, %v290
    %v306 = vpack.c.b16 %v293, %v292
    %v307 = vpack.c.b16 %v295, %v294
    %v308 = vpack.c.b16 %v297, %v296
    %v309 = vpack.c.b16 %v299, %v298
    %v310 = vpack.c.b16 %v301, %v300
    %v311 = vpack.c.b16 %v303, %v302
    %320 = vmatprep.subr.bf16.mxu0 0
    %321 = vmatpush1.bf16.msra.mxu0 %v304
    %322 = vmatprep.subr.bf16.mxu0 0
    %323 = vmatpush1.bf16.msra.mxu0 %v305
    %324 = vmatprep.subr.bf16.mxu0 0
    %325 = vmatpush1.bf16.msra.mxu0 %v306
    %326 = vmatprep.subr.bf16.mxu0 0
    %327 = vmatpush1.bf16.msra.mxu0 %v307
    %328 = vmatprep.subr.bf16.mxu0 0
    %329 = vmatpush1.bf16.msra.mxu0 %v308
    %330 = vmatprep.subr.bf16.mxu0 0
    %331 = vmatpush1.bf16.msra.mxu0 %v309
    %332 = vmatprep.subr.bf16.mxu0 0
    %333 = vmatpush1.bf16.msra.mxu0 %v310
    %334 = vmatprep.subr.bf16.mxu0 0
    %335 = vmatpush1.bf16.msra.mxu0 %v311
    %336 = vmatprep.subr.bf16.mxu0 0
    %337 = vmatpush1.bf16.msra.mxu0 0
    %338 = vmatprep.subr.bf16.mxu0 0
    %339 = vmatpush1.bf16.msra.mxu0 0
    %340 = vmatprep.subr.bf16.mxu0 0
    %341 = vmatpush1.bf16.msra.mxu0 0
    %342 = vmatprep.subr.bf16.mxu0 0
    %343 = vmatpush1.bf16.msra.mxu0 0
    %344 = vmatprep.subr.bf16.mxu0 0
    %345 = vmatpush1.bf16.msra.mxu0 0
    %346 = vmatprep.subr.bf16.mxu0 0
    %347 = vmatpush1.bf16.msra.mxu0 0
    %348 = vmatprep.subr.bf16.mxu0 0
    %349 = vmatpush1.bf16.msra.mxu0 0
    %350 = vmatprep.subr.bf16.mxu0 0
    %351 = vmatpush1.bf16.msra.mxu0 0
    %352 = vmatprep.mubr.bf16.mxu0 0
    %353 = vmatmul.mubr.bf16.gmra.mrb[0].mxu0 %v248
    %v354 = vpop.f32.mrb[0].mxu0
    %v355 = vadd.f32 %v270, %v354
    %v356 = vpop.f32.mrb[0].mxu0
    %v357 = vpop.f32.mrb[0].mxu0
    %v358 = vpop.f32.mrb[0].mxu0
    %359 = vdwg.mxu0
    %v360 = vld [vmem:[%s7] sm:$0x1]
    %v361 = vld [vmem:[%s8] sm:$0x1]
    %v362 = vsel %vm95, %v355, 0.0
    %363 = vadd.xlane.f32.xlu0 %v362
    %v364 = vpop.xlane.xlu0 %363
    %v365 = vmul.f32 %v362, %v362
    %366 = vadd.xlane.f32.xlu0 %v365
    %v367 = vpop.xlane.xlu0 %366
    %v368 = vmul.f32 %v364, 0.015625
    %v369 = vmul.f32 %v367, 0.015625
    %v370 = vmul.f32 %v368, %v368
    %v371 = vsub.f32 %v369, %v370
    %v372 = vsub.f32 %v355, %v368
    %v373 = vadd.f32 %v371, 1e-05
    %v374 = vrsqrt.pop %v373
    %v375 = vmul.f32 %v372, %v374
    %v377 = vlaneseq
    %v378 = vshrl.u32 %v377, 7
    %v379 = vsub.s32 0, %v378
    %v380 = vrot.slane %v360, %v379
    %v382 = vmul.f32 %v375, %v380
    %v384 = vlaneseq
    %v385 = vshrl.u32 %v384, 7
    %v386 = vsub.s32 0, %v385
    %v387 = vrot.slane %v361, %v386
    %v389 = vadd.f32 %v382, %v387
    %v390 = vld [vmem:[#allocation8] sm:$0xf]
    %v391 = vld [vmem:[#allocation8 + $0x4] sm:$0xf]
    %v392 = vld [vmem:[#allocation8 + $0x8] sm:$0xf]
    %v393 = vld [vmem:[#allocation8 + $0xc] sm:$0xf]
    %v394 = vld [vmem:[#allocation8 + $0x10] sm:$0xf]
    %v395 = vld [vmem:[#allocation8 + $0x14] sm:$0xf]
    %v396 = vld [vmem:[#allocation8 + $0x18] sm:$0xf]
    %v397 = vld [vmem:[#allocation8 + $0x1c] sm:$0xf]
    %v398 = vld [vmem:[#allocation8 + $0x20] sm:$0xf]
    %v399 = vld [vmem:[#allocation8 + $0x24] sm:$0xf]
    %v400 = vld [vmem:[#allocation8 + $0x28] sm:$0xf]
    %v401 = vld [vmem:[#allocation8 + $0x2c] sm:$0xf]
    %v402 = vld [vmem:[#allocation8 + $0x30] sm:$0xf]
    %v403 = vld [vmem:[#allocation8 + $0x34] sm:$0xf]
    %v404 = vld [vmem:[#allocation8 + $0x38] sm:$0xf]
    %v405 = vld [vmem:[#allocation8 + $0x3c] sm:$0xf]
    %v406 = vld [vmem:[%s10] sm:$0x1]
    %v408 = vlaneseq
    %v409 = vshrl.u32 %v408, 7
    %v410 = vsub.s32 0, %v409
    %v411 = vrot.slane %v406, %v410
    %v429 = vunpack.c.l.b16 %v390
    %v430 = vunpack.c.l.b16 %v391
    %v431 = vunpack.c.l.b16 %v392
    %v432 = vunpack.c.l.b16 %v393
    %v433 = vunpack.c.l.b16 %v394
    %v434 = vunpack.c.l.b16 %v395
    %v435 = vunpack.c.l.b16 %v396
    %v436 = vunpack.c.l.b16 %v397
    %v437 = vunpack.c.l.b16 %v398
    %v438 = vunpack.c.l.b16 %v399
    %v439 = vunpack.c.l.b16 %v400
    %v440 = vunpack.c.l.b16 %v401
    %v441 = vunpack.c.l.b16 %v402
    %v442 = vunpack.c.l.b16 %v403
    %v443 = vunpack.c.l.b16 %v404
    %v444 = vunpack.c.l.b16 %v405
    %v445 = vpack.c.b16 %v430, %v429
    %v446 = vpack.c.b16 %v432, %v431
    %v447 = vpack.c.b16 %v434, %v433
    %v448 = vpack.c.b16 %v436, %v435
    %v449 = vpack.c.b16 %v438, %v437
    %v450 = vpack.c.b16 %v440, %v439
    %v451 = vpack.c.b16 %v442, %v441
    %v452 = vpack.c.b16 %v444, %v443
    %461 = vmatprep.subr.bf16.mxu0 0
    %462 = vmatpush1.bf16.msra.mxu0 %v445
    %463 = vmatprep.subr.bf16.mxu0 0
    %464 = vmatpush1.bf16.msra.mxu0 %v446
    %465 = vmatprep.subr.bf16.mxu0 0
    %466 = vmatpush1.bf16.msra.mxu0 %v447
    %467 = vmatprep.subr.bf16.mxu0 0
    %468 = vmatpush1.bf16.msra.mxu0 %v448
    %469 = vmatprep.subr.bf16.mxu0 0
    %470 = vmatpush1.bf16.msra.mxu0 %v449
    %471 = vmatprep.subr.bf16.mxu0 0
    %472 = vmatpush1.bf16.msra.mxu0 %v450
    %473 = vmatprep.subr.bf16.mxu0 0
    %474 = vmatpush1.bf16.msra.mxu0 %v451
    %475 = vmatprep.subr.bf16.mxu0 0
    %476 = vmatpush1.bf16.msra.mxu0 %v452
    %477 = vmatprep.subr.bf16.mxu0 0
    %478 = vmatpush1.bf16.msra.mxu0 0
    %479 = vmatprep.subr.bf16.mxu0 0
    %480 = vmatpush1.bf16.msra.mxu0 0
    %481 = vmatprep.subr.bf16.mxu0 0
    %482 = vmatpush1.bf16.msra.mxu0 0
    %483 = vmatprep.subr.bf16.mxu0 0
    %484 = vmatpush1.bf16.msra.mxu0 0
    %485 = vmatprep.subr.bf16.mxu0 0
    %486 = vmatpush1.bf16.msra.mxu0 0
    %487 = vmatprep.subr.bf16.mxu0 0
    %488 = vmatpush1.bf16.msra.mxu0 0
    %489 = vmatprep.subr.bf16.mxu0 0
    %490 = vmatpush1.bf16.msra.mxu0 0
    %491 = vmatprep.subr.bf16.mxu0 0
    %492 = vmatpush1.bf16.msra.mxu0 0
    %493 = vmatprep.mubr.bf16.mxu0 0
    %494 = vmatmul.mubr.bf16.gmra.mrb[0].mxu0 %v97
    %v495 = vpop.f32.mrb[0].mxu0
    %v496 = vadd.f32 %v411, %v495
    %v497 = vpop.f32.mrb[0].mxu0
    %v498 = vpop.f32.mrb[0].mxu0
    %v499 = vpop.f32.mrb[0].mxu0
    %500 = vdwg.mxu0
    %v501 = vadd.f32 %v389, %v496
    %v502 = vmul.f32 %v501, 0.5
    %v503 = vmul.f32 %v501, 0.044715
    %v504 = vmul.f32 %v503, %v501
    %v505 = vmul.f32 %v504, %v501
    %v506 = vadd.f32 %v501, %v505
    %v507 = vmul.f32 %v506, 0.7978846
    %v508 = vtanh.pop %v507
    %v509 = vadd.f32 %v508, 1.0
    %v510 = vmul.f32 %v502, %v509
    %511 = vst [vmem:[#allocation10] sm:$0xff] %v510
    // Predicated region
    $region62: #{tpu_custom_call.1} parent=1 // pred_check
      _
    $region63: #{tpu_custom_call.1} parent=1 // pred_check_branch
      %513 = sbr.rel (0) target = $region65
    $region64: #{tpu_custom_call.1} parent=1 // pred_region
      %s515 = ssub.s32 128, 128
      %516 = vsyncadd [#allocation4], %s515
      %s518 = sshll.u32 [#allocation10], 4
      %s519 = int_to_ptr.vmem [resolvable:$true] %s518
      %521 = dma.vmem_to_hbm [thread:$0]  %s519, 128, %s11, [#allocation4]
    $region65: #{tpu_custom_call.1} parent=1 // pred_fallthru
      _
    // Predicated region
    $region66: #{tpu_custom_call.1} parent=1 // pred_check
      _
    $region67: #{tpu_custom_call.1} parent=1 // pred_check_branch
      %523 = sbr.rel (0) target = $region69
    $region68: #{tpu_custom_call.1} parent=1 // pred_region
      %524 = dma.done [#allocation4], 128
    $region69: #{tpu_custom_call.1} parent=1 // pred_fallthru
      _
    %525 = vsyncpa [#allocation3], 1
    %526 = vsyncpa [#allocation6], 1
    %527 = vsyncpa [#allocation9], 1
    %528 = vsyncpa [#allocation4], 1

</llo_original>
